<compile_context>
chip_gen: v6e
topology: v6e:2x2x1
jax: 0.10.0
libtpu: 0.0.40
codegen_flags: <defaults>
</compile_context>

<pallas_src>
from functools import partial
from typing import Optional, Tuple

import jax
import jax.numpy as jnp
from jax.experimental import pallas as pl
from jax.experimental.pallas import tpu as pltpu


# ----------------------------------------------------------------------------
# Module hyper-parameter helper (mirrors the PyTorch __init__).
# ----------------------------------------------------------------------------
def _llama_hidden_dim(dim: int, hidden_dim: int, multiple_of: int,
                      ffn_dim_multiplier: Optional[float]) -> int:
    hidden_dim = int(2 * hidden_dim / 3)
    if ffn_dim_multiplier is not None:
        hidden_dim = int(ffn_dim_multiplier * hidden_dim)
    hidden_dim = multiple_of * ((hidden_dim + multiple_of - 1) // multiple_of)
    return hidden_dim


def _round_up(x: int, m: int) -> int:
    return ((x + m - 1) // m) * m


def _sublane_pack(dtype) -> int:
    """Minimum sublane tile for a dtype (8 for 4B, 16 for 2B, 32 for 1B)."""
    return max(8, 32 // jnp.dtype(dtype).itemsize)


def _tpu_generation() -> str:
    try:
        kind = jax.devices()[0].device_kind.lower()
    except Exception:  # pragma: no cover
        return "unknown"
    if "v5e" in kind or "v5 lite" in kind or "v5lite" in kind:
        return "v5e"
    if "v6" in kind:
        return "v6e"
    if "v7" in kind:
        return "v7x"
    return "unknown"


def _vmem_capacity_bytes() -> int:
    try:
        return int(pltpu.get_tpu_info().vmem_capacity_bytes)
    except Exception:  # pragma: no cover
        return (64 << 20) if _tpu_generation() == "v7x" else (128 << 20)


def _vmem_ceiling_bytes() -> int:
    # Leave headroom for Mosaic internal scratch: ~56 MiB on v7x (64 MiB phys),
    # ~108 MiB on v5e/v6e (128 MiB phys).
    return int(_vmem_capacity_bytes() * 0.85)


def _default_tiles() -> Tuple[int, int]:
    """Generation-aware (tm, th) defaults (token tile, hidden tile)."""
    gen = _tpu_generation()
    if gen == "v5e":
        return 256, 512          # crossover ~240 FLOPs/byte, 128 MiB VMEM
    if gen == "v7x":
        return 512, 256          # 64 MiB VMEM -> smaller hidden tile
    if gen == "v6e":
        return 512, 512          # crossover ~650 FLOPs/byte, 128 MiB VMEM
    return 256, 256              # conservative default


def ffn_tile_sizes(M: int, D: int, H: int, dtype=jnp.float32,
                   w_dtype=None) -> Tuple[int, int]:
    """Pick (tm, th) that fit the generation's VMEM budget for the streaming path."""
    tm, th = _default_tiles()
    pack = _sublane_pack(dtype)
    tm = max(pack, min(_round_up(tm, pack), _round_up(max(M, 1), pack)))
    th = min(th, _round_up(H, 128))

    x_item = jnp.dtype(dtype).itemsize
    w_item = jnp.dtype(w_dtype or dtype).itemsize
    ceiling = _vmem_ceiling_bytes()

    def need(tm_, th_):
        n_sub = 2 if th_ % 256 == 0 else 1
        return (2 * tm_ * D * x_item            # x tiles (worst case 2 buffers)
                + 2 * D * 2 * th_ * w_item      # w13 tiles
                + 2 * th_ * D * w_item          # w2 tiles
                + 2 * tm_ * D * x_item          # out tiles
                + tm_ * D * 4                   # f32 accumulator scratch
                + tm_ * 2 * th_ * 4             # h13 f32 intermediate
                + 3 * tm_ * (th_ // n_sub) * 4  # gate intermediates
                + (2 << 20))                    # slack

    while need(tm, th) > ceiling:
        if th > 256:
            th //= 2
        elif tm > 128:
            tm = max(128, tm // 2)
        elif th > 128:
            th //= 2
        elif tm > pack:
            tm = max(pack, tm // 2)
        else:
            break
    return tm, th


# ----------------------------------------------------------------------------
# One-time weight preparation (parameter-load time, NOT per forward call).
# ----------------------------------------------------------------------------
def prepare_ffn_weights(w1, w2, w3, *, th: int):
    """w1, w3: (H, D); w2: (D, H)  (PyTorch nn.Linear layout).

    Returns:
      w13 : (D, 2*H_pad)  -- per-H-tile interleaved [w1_tile | w3_tile | ...]
      w2t : (H_pad, D)
    """
    H, D = w1.shape
    H_pad = _round_up(H, th)

    w1_t = w1.T
    w3_t = w3.T
    w2_t = w2.T
    if H_pad != H:
        pad = H_pad - H
        w1_t = jnp.pad(w1_t, ((0, 0), (0, pad)))
        w3_t = jnp.pad(w3_t, ((0, 0), (0, pad)))
        w2_t = jnp.pad(w2_t, ((0, pad), (0, 0)))

    n_h = H_pad // th
    w13 = jnp.concatenate(
        [w1_t.reshape(D, n_h, th), w3_t.reshape(D, n_h, th)], axis=2
    ).reshape(D, 2 * H_pad)
    return w13, w2_t


# ----------------------------------------------------------------------------
# Kernels.
# ----------------------------------------------------------------------------
def _ffn_streaming_kernel(x_ref, w13_ref, w2_ref, o_ref, acc_ref, *, n_sub):
    # x_ref: (tm, D)   w13_ref: (D, 2*th)   w2_ref: (th, D)
    # o_ref: (tm, D)   acc_ref: (tm, D) f32 scratch (persists across h steps)
    h = pl.program_id(1)

    @pl.when(h == 0)
    def _init():
        acc_ref[...] = jnp.zeros_like(acc_ref)

    th = w2_ref.shape[0]
    ths = th // n_sub
    x = x_ref[...]

    # One fused matmul for w1 and w3 on this hidden tile (f32 accumulation).
    h13 = jnp.dot(x, w13_ref[...], preferred_element_type=jnp.float32)  # (tm, 2*th)

    # Unrolled sub-chunks: the w2 matmul of chunk j overlaps the SiLU gate of
    # chunk j+1 (MXU vs EUP/VPU slots).
    contrib_sum = None
    for j in range(n_sub):
        lo = j * ths
        h1 = h13[:, lo:lo + ths]
        h3 = h13[:, th + lo:th + lo + ths]
        g = (h1 * jax.nn.sigmoid(h1)) * h3          # SwiGLU gate in f32
        contrib = jnp.dot(g.astype(w2_ref.dtype), w2_ref[lo:lo + ths, :],
                          preferred_element_type=jnp.float32)
        contrib_sum = contrib if contrib_sum is None else contrib_sum + contrib
    acc_ref[...] += contrib_sum

    @pl.when(h == pl.num_programs(1) - 1)
    def _finalize():
        o_ref[...] = acc_ref[...].astype(o_ref.dtype)


def _ffn_resident_kernel(x_ref, w13_ref, w2_ref, o_ref, *, th, n_h):
    # Weights fully resident in VMEM; full hidden reduction per token tile.
    # x_ref: (tm, D)   w13_ref: (D, 2*H_pad)   w2_ref: (H_pad, D)   o_ref: (tm, D)
    x = x_ref[...]
    acc = None
    for j in range(n_h):
        base = 2 * th * j
        h13 = jnp.dot(x, w13_ref[:, base:base + 2 * th],
                      preferred_element_type=jnp.float32)
        h1 = h13[:, :th]
        h3 = h13[:, th:]
        g = (h1 * jax.nn.sigmoid(h1)) * h3
        contrib = jnp.dot(g.astype(w2_ref.dtype), w2_ref[j * th:(j + 1) * th, :],
                          preferred_element_type=jnp.float32)
        acc = contrib if acc is None else acc + contrib
    o_ref[...] = acc.astype(o_ref.dtype)


# ----------------------------------------------------------------------------
# BlockSpec helper (pipeline_mode with graceful fallback).
# ----------------------------------------------------------------------------
def _block_spec(block_shape, index_map, buffers, use_buffered):
    if use_buffered and buffers is not None and buffers != 2:
        try:
            return pl.BlockSpec(block_shape, index_map,
                                pipeline_mode=pl.Buffered(buffers))
        except TypeError:
            pass
    return pl.BlockSpec(block_shape, index_map)


# ----------------------------------------------------------------------------
# pallas_call builders.
# ----------------------------------------------------------------------------
def _streaming_call(x2d, w13, w2_t, *, tm, th, n_m, n_h, n_sub, w_buf,
                    vmem_limit, cost, use_buffered):
    D = x2d.shape[1]
    kernel = partial(_ffn_streaming_kernel, n_sub=n_sub)
    return pl.pallas_call(
        kernel,
        out_shape=jax.ShapeDtypeStruct((tm * n_m, D), x2d.dtype),
        grid_spec=pltpu.PrefetchScalarGridSpec(
            num_scalar_prefetch=0,
            grid=(n_m, n_h),                       # hidden (reduction) axis last
            in_specs=[
                # x tile: block index only changes on i -> single buffer.
                _block_spec((tm, D), lambda i, h: (i, 0), 1, use_buffered),
                # Fused w1|w3 tile and w2 tile: the streamed weight pipeline.
                _block_spec((D, 2 * th), lambda i, h: (0, h), w_buf, use_buffered),
                _block_spec((th, D), lambda i, h: (h, 0), w_buf, use_buffered),
            ],
            out_specs=_block_spec((tm, D), lambda i, h: (i, 0), 1, use_buffered),
            scratch_shapes=[pltpu.VMEM((tm, D), jnp.float32)],
        ),
        compiler_params=pltpu.CompilerParams(
            dimension_semantics=("parallel", "arbitrary"),
            vmem_limit_bytes=vmem_limit,
        ),
        cost_estimate=cost,
    )(x2d, w13, w2_t)


def _resident_call(x2d, w13, w2_t, *, tm, th, n_m, n_h,
                   vmem_limit, cost, use_buffered):
    D = x2d.shape[1]
    H_pad = w2_t.shape[0]
    kernel = partial(_ffn_resident_kernel, th=th, n_h=n_h)
    return pl.pallas_call(
        kernel,
        out_shape=jax.ShapeDtypeStruct((tm * n_m, D), x2d.dtype),
        grid_spec=pltpu.PrefetchScalarGridSpec(
            num_scalar_prefetch=0,
            grid=(n_m,),
            in_specs=[
                _block_spec((tm, D), lambda i: (i, 0), None, use_buffered),
                # Constant block index -> resident; single buffer saves VMEM.
                _block_spec((D, 2 * H_pad), lambda i: (0, 0), 1, use_buffered),
                _block_spec((H_pad, D), lambda i: (0, 0), 1, use_buffered),
            ],
            out_specs=_block_spec((tm, D), lambda i: (i, 0), None, use_buffered),
        ),
        compiler_params=pltpu.CompilerParams(
            dimension_semantics=("parallel",),
            vmem_limit_bytes=vmem_limit,
        ),
        cost_estimate=cost,
    )(x2d, w13, w2_t)


# ----------------------------------------------------------------------------
# Forward wrapper.
# ----------------------------------------------------------------------------
def feed_forward_pallas(x, w13, w2_t, *, tm: int, th: int,
                        weights_resident: Optional[bool] = None):
    """x: (B, S, D).  w13: (D, 2*H_pad), w2_t: (H_pad, D) from prepare_ffn_weights."""
    B, S, D = x.shape
    H_pad = w2_t.shape[0]
    assert w13.shape == (D, 2 * H_pad)
    assert H_pad % th == 0 and th % 128 == 0

    x_item = jnp.dtype(x.dtype).itemsize
    w_item = jnp.dtype(w13.dtype).itemsize
    pack = _sublane_pack(x.dtype)

    M = B * S
    # Clamp tm to this call's token count; keep it a multiple of the sublane pack.
    tm = max(pack, min(_round_up(tm, pack), _round_up(M, pack)))

    capacity = _vmem_capacity_bytes()
    ceiling = _vmem_ceiling_bytes()

    n_h = H_pad // th
    n_sub = 2 if th % 256 == 0 else 1

    # ---- streaming-path footprint; shrink tm (never th: it fixes the w13
    # interleave) and the weight-buffer depth until it fits -------------------
    w_buf = 3 if M <= tm else 2    # deeper weight pipelining for decode shapes

    def _stream_need(tm_, w_buf_):
        return (tm_ * D * x_item                      # x (Buffered(1))
                + w_buf_ * D * 2 * th * w_item        # w13 tiles
                + w_buf_ * th * D * w_item            # w2 tiles
                + tm_ * D * x_item                    # out (Buffered(1))
                + tm_ * D * 4                         # f32 accumulator scratch
                + tm_ * 2 * th * 4                    # h13 f32 intermediate
                + 3 * tm_ * (th // n_sub) * 4         # gate intermediates
                + (2 << 20))                          # slack

    if _stream_need(tm, w_buf) > ceiling:
        w_buf = 2
    while _stream_need(tm, w_buf) > ceiling and tm > pack:
        tm = max(pack, tm // 2)

    M_pad = _round_up(M, tm)
    n_m = M_pad // tm

    # ---- weights-resident fast path decision --------------------------------
    resident_need = ((D * 2 * H_pad + H_pad * D) * w_item   # weights, 1 buffer each
                     + 2 * tm * D * x_item                  # x double buffer
                     + 2 * tm * D * x_item                  # out double buffer
                     + tm * 2 * th * 4                      # per-chunk h13
                     + 3 * tm * th * 4                      # per-chunk gate temps
                     + tm * D * 4                           # local accumulator
                     + (2 << 20))
    if weights_resident is None:
        use_resident = resident_need <= int(capacity * 0.6)
    else:
        use_resident = bool(weights_resident) and resident_need <= ceiling

    # ---- pad tokens, build cost estimate ------------------------------------
    x2d = x.reshape(M, D)
    if M_pad != M:
        x2d = jnp.pad(x2d, ((0, M_pad - M), (0, 0)))

    cost = pl.CostEstimate(
        flops=6 * M_pad * D * H_pad,
        transcendentals=M_pad * H_pad,
        bytes_accessed=int(x2d.size * x_item + w13.size * w_item
                           + w2_t.size * w_item + M_pad * D * x_item),
    )

    if use_resident:
        vmem_limit = int(min(ceiling, max(resident_need, 32 << 20)))
        builder = partial(_resident_call, x2d, w13, w2_t, tm=tm, th=th,
                          n_m=n_m, n_h=n_h, vmem_limit=vmem_limit, cost=cost)
    else:
        vmem_limit = int(min(ceiling, max(_stream_need(tm, w_buf), 32 << 20)))
        builder = partial(_streaming_call, x2d, w13, w2_t, tm=tm, th=th,
                          n_m=n_m, n_h=n_h, n_sub=n_sub, w_buf=w_buf,
                          vmem_limit=vmem_limit, cost=cost)

    try:
        out2d = builder(use_buffered=True)
    except Exception:
        # Fall back to default double-buffering if pipeline_mode=Buffered(k)
        # is rejected by this JAX / Mosaic version.
        out2d = builder(use_buffered=False)

    return out2d[:M].reshape(B, S, D)


# ----------------------------------------------------------------------------
# Pure-JAX reference (PyTorch-layout weights).
# ----------------------------------------------------------------------------
def feed_forward_ref(x, w1, w2, w3):
    h1 = jnp.einsum("bsd,hd->bsh", x, w1)
    h3 = jnp.einsum("bsd,hd->bsh", x, w3)
    g = jax.nn.silu(h1) * h3
    return jnp.einsum("bsh,dh->bsd", g, w2)


# ----------------------------------------------------------------------------
# Self-test.
# ----------------------------------------------------------------------------
if __name__ == "__main__":
    dim = 128
    hidden_dim_arg = 256
    multiple_of = 128
    ffn_dim_multiplier = None
    hidden = _llama_hidden_dim(dim, hidden_dim_arg, multiple_of, ffn_dim_multiplier)  # 256

    B, S = 2, 8  # 16 tokens (exercises the M-padding / small-tm path)

    key = jax.random.PRNGKey(0)
    kx, k1, k2, k3 = jax.random.split(key, 4)
    x = jax.random.normal(kx, (B, S, dim), dtype=jnp.float32)
    # nn.Linear(in, out, bias=False) weight shape is (out, in).
    w1 = jax.random.normal(k1, (hidden, dim), dtype=jnp.float32) * 0.02
    w2 = jax.random.normal(k2, (dim, hidden), dtype=jnp.float32) * 0.02
    w3 = jax.random.normal(k3, (hidden, dim), dtype=jnp.float32) * 0.02

    # Tile selection + one-time weight prep (hoisted out of the forward path).
    tm, th = ffn_tile_sizes(M=B * S, D=dim, H=hidden, dtype=x.dtype)
    w13, w2_t = prepare_ffn_weights(w1, w2, w3, th=th)
    w13 = jax.block_until_ready(w13)
    w2_t = jax.block_until_ready(w2_t)

    ref = feed_forward_ref(x, w1, w2, w3)

    # Path 1: auto (weights-resident fast path for these small weights).
    out_res = feed_forward_pallas(x, w13, w2_t, tm=tm, th=th)
    out_res = jax.block_until_ready(out_res)
    assert out_res.shape == (B, S, dim)
    assert jnp.allclose(out_res, ref, atol=1e-4, rtol=1e-4), "resident path mismatch"

    # Path 2: forced weight-streaming path (the large-model configuration).
    out_str = feed_forward_pallas(x, w13, w2_t, tm=tm, th=th, weights_resident=False)
    out_str = jax.block_until_ready(out_str)
    assert out_str.shape == (B, S, dim)
    assert jnp.allclose(out_str, ref, atol=1e-4, rtol=1e-4), "streaming path mismatch"

    print("KERNEL_OK")
</pallas_src>

<mosaic_0001>
module attributes {stable_mosaic.version = 11 : i64} {
  func.func @_ffn_resident_kernel(%arg0: i32, %arg1: memref<16x128xf32, #tpu.memory_space<vmem>>, %arg2: memref<128x512xf32, #tpu.memory_space<vmem>>, %arg3: memref<256x128xf32, #tpu.memory_space<vmem>>, %arg4: memref<16x128xf32, #tpu.memory_space<vmem>>) attributes {dimension_semantics = [#tpu.dimension_semantics<parallel>], iteration_bounds = array<i64: 1>, scalar_prefetch = 0 : i64, scratch_operands = 0 : i64, tpu.core_type = #tpu.core_type<tc>, window_params = [{transform_indices = @transform_0, window_bounds = array<i64: 16, 128>}, {pipeline_mode = #tpu.pipeline_mode<synchronous>, transform_indices = @transform_1, window_bounds = array<i64: 128, 512>}, {pipeline_mode = #tpu.pipeline_mode<synchronous>, transform_indices = @transform_2, window_bounds = array<i64: 256, 128>}, {transform_indices = @transform_3, window_bounds = array<i64: 16, 128>}]} {
    %c0 = arith.constant 0 : index
    %c0_0 = arith.constant 0 : index
    %0 = vector.load %arg1[%c0, %c0_0] : memref<16x128xf32, #tpu.memory_space<vmem>>, vector<16x128xf32>
    %c0_1 = arith.constant 0 : index
    %c0_2 = arith.constant 0 : index
    %1 = vector.load %arg2[%c0_1, %c0_2] : memref<128x512xf32, #tpu.memory_space<vmem>>, vector<128x512xf32>
    %cst = arith.constant dense<0.000000e+00> : vector<16x512xf32>
    %2 = tpu.matmul %0, %1, %cst {dimension_numbers = #tpu.dot_dimension_numbers<[1], [0], [0], [1], [0, 0, 1, 1], [], []>} : vector<16x128xf32>, vector<128x512xf32>, vector<16x512xf32> -> vector<16x512xf32>
    %3 = vector.extract_strided_slice %2 {offsets = [0, 0], sizes = [16, 256], strides = [1, 1]} : vector<16x512xf32> to vector<16x256xf32>
    %4 = vector.extract_strided_slice %2 {offsets = [0, 256], sizes = [16, 256], strides = [1, 1]} : vector<16x512xf32> to vector<16x256xf32>
    %5 = arith.negf %3 : vector<16x256xf32>
    %6 = math.exp %5 : vector<16x256xf32>
    %cst_3 = arith.constant 1.000000e+00 : f32
    %7 = vector.broadcast %cst_3 : f32 to vector<16x256xf32>
    %8 = arith.addf %7, %6 : vector<16x256xf32>
    %9 = arith.divf %7, %8 : vector<16x256xf32>
    %10 = arith.mulf %3, %9 : vector<16x256xf32>
    %11 = arith.mulf %10, %4 : vector<16x256xf32>
    %c0_4 = arith.constant 0 : index
    %c0_5 = arith.constant 0 : index
    %12 = vector.load %arg3[%c0_4, %c0_5] : memref<256x128xf32, #tpu.memory_space<vmem>>, vector<256x128xf32>
    %cst_6 = arith.constant dense<0.000000e+00> : vector<16x128xf32>
    %13 = tpu.matmul %11, %12, %cst_6 {dimension_numbers = #tpu.dot_dimension_numbers<[1], [0], [0], [1], [0, 0, 1, 1], [], []>} : vector<16x256xf32>, vector<256x128xf32>, vector<16x128xf32> -> vector<16x128xf32>
    %c0_7 = arith.constant 0 : index
    %c0_8 = arith.constant 0 : index
    %14 = vector.load %arg4[%c0_7, %c0_8] : memref<16x128xf32, #tpu.memory_space<vmem>>, vector<16x128xf32>
    tpu.vector_store %arg4[%c0_7, %c0_8], %13 {strides = array<i32>} : memref<16x128xf32, #tpu.memory_space<vmem>>, vector<16x128xf32>,
    return
  }
  func.func @transform_0(%arg0: i32) -> (i32, i32) {
    %c0_i32 = arith.constant 0 : i32
    %c0_i32_0 = arith.constant 0 : i32
    return %arg0, %c0_i32 : i32, i32
  }
  func.func @transform_1(%arg0: i32) -> (i32, i32) {
    %c0_i32 = arith.constant 0 : i32
    %c0_i32_0 = arith.constant 0 : i32
    %c0_i32_1 = arith.constant 0 : i32
    return %c0_i32, %c0_i32_0 : i32, i32
  }
  func.func @transform_2(%arg0: i32) -> (i32, i32) {
    %c0_i32 = arith.constant 0 : i32
    %c0_i32_0 = arith.constant 0 : i32
    %c0_i32_1 = arith.constant 0 : i32
    return %c0_i32, %c0_i32_0 : i32, i32
  }
  func.func @transform_3(%arg0: i32) -> (i32, i32) {
    %c0_i32 = arith.constant 0 : i32
    %c0_i32_0 = arith.constant 0 : i32
    return %arg0, %c0_i32 : i32, i32
  }
}

module attributes {stable_mosaic.version = 11 : i64} {
  func.func @_ffn_resident_kernel(%arg0: i32, %arg1: memref<16x128xf32, #tpu.memory_space<vmem>>, %arg2: memref<128x512xf32, #tpu.memory_space<vmem>>, %arg3: memref<256x128xf32, #tpu.memory_space<vmem>>, %arg4: memref<16x128xf32, #tpu.memory_space<vmem>>) attributes {dimension_semantics = [#tpu.dimension_semantics<parallel>], iteration_bounds = array<i64: 1>, scalar_prefetch = 0 : i64, scratch_operands = 0 : i64, tpu.core_type = #tpu.core_type<tc>, window_params = [{transform_indices = @transform_0, window_bounds = array<i64: 16, 128>}, {pipeline_mode = #tpu.pipeline_mode<synchronous>, transform_indices = @transform_1, window_bounds = array<i64: 128, 512>}, {pipeline_mode = #tpu.pipeline_mode<synchronous>, transform_indices = @transform_2, window_bounds = array<i64: 256, 128>}, {transform_indices = @transform_3, window_bounds = array<i64: 16, 128>}]} {
    %c0 = arith.constant 0 : index
    %c0_0 = arith.constant 0 : index
    %0 = vector.load %arg1[%c0, %c0_0] : memref<16x128xf32, #tpu.memory_space<vmem>>, vector<16x128xf32>
    %c0_1 = arith.constant 0 : index
    %c0_2 = arith.constant 0 : index
    %1 = vector.load %arg2[%c0_1, %c0_2] : memref<128x512xf32, #tpu.memory_space<vmem>>, vector<128x512xf32>
    %cst = arith.constant dense<0.000000e+00> : vector<16x512xf32>
    %2 = tpu.matmul %0, %1, %cst {dimension_numbers = #tpu.dot_dimension_numbers<[1], [0], [0], [1], [0, 0, 1, 1], [], []>} : vector<16x128xf32>, vector<128x512xf32>, vector<16x512xf32> -> vector<16x512xf32>
    %3 = vector.extract_strided_slice %2 {offsets = [0, 0], sizes = [16, 256], strides = [1, 1]} : vector<16x512xf32> to vector<16x256xf32>
    %4 = vector.extract_strided_slice %2 {offsets = [0, 256], sizes = [16, 256], strides = [1, 1]} : vector<16x512xf32> to vector<16x256xf32>
    %5 = arith.negf %3 : vector<16x256xf32>
    %6 = math.exp %5 : vector<16x256xf32>
    %cst_3 = arith.constant 1.000000e+00 : f32
    %7 = vector.broadcast %cst_3 : f32 to vector<16x256xf32>
    %8 = arith.addf %7, %6 : vector<16x256xf32>
    %9 = arith.divf %7, %8 : vector<16x256xf32>
    %10 = arith.mulf %3, %9 : vector<16x256xf32>
    %11 = arith.mulf %10, %4 : vector<16x256xf32>
    %c0_4 = arith.constant 0 : index
    %c0_5 = arith.constant 0 : index
    %12 = vector.load %arg3[%c0_4, %c0_5] : memref<256x128xf32, #tpu.memory_space<vmem>>, vector<256x128xf32>
    %cst_6 = arith.constant dense<0.000000e+00> : vector<16x128xf32>
    %13 = tpu.matmul %11, %12, %cst_6 {dimension_numbers = #tpu.dot_dimension_numbers<[1], [0], [0], [1], [0, 0, 1, 1], [], []>} : vector<16x256xf32>, vector<256x128xf32>, vector<16x128xf32> -> vector<16x128xf32>
    %c0_7 = arith.constant 0 : index
    %c0_8 = arith.constant 0 : index
    %14 = vector.load %arg4[%c0_7, %c0_8] : memref<16x128xf32, #tpu.memory_space<vmem>>, vector<16x128xf32>
    tpu.vector_store %arg4[%c0_7, %c0_8], %13 {strides = array<i32>} : memref<16x128xf32, #tpu.memory_space<vmem>>, vector<16x128xf32>,
    return
  }
  func.func @transform_0(%arg0: i32) -> (i32, i32) {
    %c0_i32 = arith.constant 0 : i32
    %c0_i32_0 = arith.constant 0 : i32
    return %arg0, %c0_i32 : i32, i32
  }
  func.func @transform_1(%arg0: i32) -> (i32, i32) {
    %c0_i32 = arith.constant 0 : i32
    %c0_i32_0 = arith.constant 0 : i32
    %c0_i32_1 = arith.constant 0 : i32
    return %c0_i32, %c0_i32_0 : i32, i32
  }
  func.func @transform_2(%arg0: i32) -> (i32, i32) {
    %c0_i32 = arith.constant 0 : i32
    %c0_i32_0 = arith.constant 0 : i32
    %c0_i32_1 = arith.constant 0 : i32
    return %c0_i32, %c0_i32_0 : i32, i32
  }
  func.func @transform_3(%arg0: i32) -> (i32, i32) {
    %c0_i32 = arith.constant 0 : i32
    %c0_i32_0 = arith.constant 0 : i32
    return %arg0, %c0_i32 : i32, i32
  }
}

</mosaic_0001>

<llo_original>
// kernel: tpu_custom_call.1
$region0: #{tpu_custom_call.1}
  #allocation0 [shape = 'u32[]', space=smem, size = 0x4, offset = 0x4, fixed_abs, tag = 'smem constant byte address 0x4 - core index']
  #allocation1 [shape = 'u32[144,128]{1,0:T(1,128)}', space=vmem, size = 0x12000, scoped, tag = 'internal scratch']
  %s0 = inlined_call_operand.hbm [shape: f32[16,128], index: 0, kind: input, shape index: {}]
  %s1 = inlined_call_operand.hbm [shape: f32[128,512], index: 1, kind: input, shape index: {}]
  %s2 = inlined_call_operand.hbm [shape: f32[256,128], index: 2, kind: input, shape index: {}]
  %s3 = inlined_call_operand.hbm [shape: f32[16,128], index: 3, kind: output, shape index: {}]
  %s4 = sld [smem:[#allocation0]]
  $region34: #{tpu_custom_call.1} parent=0
    _
  %s6 = ssub.s32 1, %s4
  %s7 = scalar_select 0, %s6, %s4
  $region1: #{tpu_custom_call.1} parent=0
    #allocation2 [shape = 'u8[8192]{0}', space=vmem, size = 0x2000, scoped, tag = 'input window, operand 0, single buffered']
    #allocation3 [shape = 's32[1]{0}', space=sflag, size = 0x4, scoped, tag = 'scoped memory for tpu_custom_call.1']
    #allocation4 [shape = 's32[1]{0}', space=sflag, size = 0x4, scoped, tag = 'scoped memory for tpu_custom_call.1']
    #allocation5 [shape = 'u8[262144]{0}', space=vmem, size = 0x40000, scoped, tag = 'input window, operand 1, single buffered']
    #allocation6 [shape = 's32[1]{0}', space=sflag, size = 0x4, scoped, tag = 'scoped memory for tpu_custom_call.1']
    #allocation7 [shape = 'u8[131072]{0}', space=vmem, size = 0x20000, scoped, tag = 'input window, operand 2, single buffered']
    #allocation8 [shape = 'u8[8192]{0}', space=vmem, size = 0x2000, scoped, tag = 'output window, operand 0, single buffered']
    %8 = vsyncpa [#allocation3], 0
    %9 = vsyncpa [#allocation6], 0
    %10 = vsyncpa [#allocation4], 0
    // Predicated region
    $region2: #{tpu_custom_call.1} parent=1 // pred_check
      _
    $region3: #{tpu_custom_call.1} parent=1 // pred_check_branch
      %12 = sbr.rel (0) target = $region5
    $region4: #{tpu_custom_call.1} parent=1 // pred_region
      %s14 = ssub.s32 256, 256
      %15 = vsyncadd [#allocation3], %s14
      %s16 = sshll.u32 [#allocation2], 4
      %s17 = int_to_ptr.vmem [resolvable:$true] %s16
      %22 = dma.hbm_to_vmem [thread:$0]  %s0, 256, %s17, [#allocation3], 128, 128, 8
    $region5: #{tpu_custom_call.1} parent=1 // pred_fallthru
      _
    // Predicated region
    $region6: #{tpu_custom_call.1} parent=1 // pred_check
      _
    $region7: #{tpu_custom_call.1} parent=1 // pred_check_branch
      %24 = sbr.rel (0) target = $region9
    $region8: #{tpu_custom_call.1} parent=1 // pred_region
      %s26 = ssub.s32 8192, 8192
      %27 = vsyncadd [#allocation6], %s26
      %s28 = sshll.u32 [#allocation5], 4
      %s29 = int_to_ptr.vmem [resolvable:$true] %s28
      %34 = dma.hbm_to_vmem [thread:$0]  %s1, 8192, %s29, [#allocation6], 512, 512, 32
    $region9: #{tpu_custom_call.1} parent=1 // pred_fallthru
      _
    // Predicated region
    $region10: #{tpu_custom_call.1} parent=1 // pred_check
      _
    $region11: #{tpu_custom_call.1} parent=1 // pred_check_branch
      %36 = sbr.rel (0) target = $region13
    $region12: #{tpu_custom_call.1} parent=1 // pred_region
      %s38 = ssub.s32 4096, 4096
      %39 = vsyncadd [#allocation6], %s38
      %s40 = sshll.u32 [#allocation7], 4
      %s41 = int_to_ptr.vmem [resolvable:$true] %s40
      %46 = dma.hbm_to_vmem [thread:$0]  %s2, 4096, %s41, [#allocation6], 128, 128, 8
    $region13: #{tpu_custom_call.1} parent=1 // pred_fallthru
      _
    // Predicated region
    $region14: #{tpu_custom_call.1} parent=1 // pred_check
      _
    $region15: #{tpu_custom_call.1} parent=1 // pred_check_branch
      %48 = sbr.rel (0) target = $region17
    $region16: #{tpu_custom_call.1} parent=1 // pred_region
      %49 = dma.done [#allocation3], 256
    $region17: #{tpu_custom_call.1} parent=1 // pred_fallthru
      _
    // Predicated region
    $region18: #{tpu_custom_call.1} parent=1 // pred_check
      _
    $region19: #{tpu_custom_call.1} parent=1 // pred_check_branch
      %51 = sbr.rel (0) target = $region21
    $region20: #{tpu_custom_call.1} parent=1 // pred_region
      %52 = dma.done [#allocation6], 8192
    $region21: #{tpu_custom_call.1} parent=1 // pred_fallthru
      _
    // Predicated region
    $region22: #{tpu_custom_call.1} parent=1 // pred_check
      _
    $region23: #{tpu_custom_call.1} parent=1 // pred_check_branch
      %54 = sbr.rel (0) target = $region25
    $region24: #{tpu_custom_call.1} parent=1 // pred_region
      %55 = dma.done [#allocation6], 4096
    $region25: #{tpu_custom_call.1} parent=1 // pred_fallthru
      _
    %v56 = vld [vmem:[#allocation2] sm:$0xff]
    %v57 = vld [vmem:[#allocation2 + $0x8] sm:$0xff]
    %v58 = vld [vmem:[#allocation5] sm:$0xff]
    %v59 = vld [vmem:[#allocation5 + $0x8] sm:$0xff]
    %v60 = vld [vmem:[#allocation5 + $0x10] sm:$0xff]
    %v61 = vld [vmem:[#allocation5 + $0x18] sm:$0xff]
    %v62 = vld [vmem:[#allocation5 + $0x20] sm:$0xff]
    %v63 = vld [vmem:[#allocation5 + $0x28] sm:$0xff]
    %v64 = vld [vmem:[#allocation5 + $0x30] sm:$0xff]
    %v65 = vld [vmem:[#allocation5 + $0x38] sm:$0xff]
    %v66 = vld [vmem:[#allocation5 + $0x40] sm:$0xff]
    %v67 = vld [vmem:[#allocation5 + $0x48] sm:$0xff]
    %v68 = vld [vmem:[#allocation5 + $0x50] sm:$0xff]
    %v69 = vld [vmem:[#allocation5 + $0x58] sm:$0xff]
    %v70 = vld [vmem:[#allocation5 + $0x60] sm:$0xff]
    %v71 = vld [vmem:[#allocation5 + $0x68] sm:$0xff]
    %v72 = vld [vmem:[#allocation5 + $0x70] sm:$0xff]
    %v73 = vld [vmem:[#allocation5 + $0x78] sm:$0xff]
    %v74 = vld [vmem:[#allocation5 + $0x80] sm:$0xff]
    %v75 = vld [vmem:[#allocation5 + $0x88] sm:$0xff]
    %v76 = vld [vmem:[#allocation5 + $0x90] sm:$0xff]
    %v77 = vld [vmem:[#allocation5 + $0x98] sm:$0xff]
    %v78 = vld [vmem:[#allocation5 + $0xa0] sm:$0xff]
    %v79 = vld [vmem:[#allocation5 + $0xa8] sm:$0xff]
    %v80 = vld [vmem:[#allocation5 + $0xb0] sm:$0xff]
    %v81 = vld [vmem:[#allocation5 + $0xb8] sm:$0xff]
    %v82 = vld [vmem:[#allocation5 + $0xc0] sm:$0xff]
    %v83 = vld [vmem:[#allocation5 + $0xc8] sm:$0xff]
    %v84 = vld [vmem:[#allocation5 + $0xd0] sm:$0xff]
    %v85 = vld [vmem:[#allocation5 + $0xd8] sm:$0xff]
    %v86 = vld [vmem:[#allocation5 + $0xe0] sm:$0xff]
    %v87 = vld [vmem:[#allocation5 + $0xe8] sm:$0xff]
    %v88 = vld [vmem:[#allocation5 + $0xf0] sm:$0xff]
    %v89 = vld [vmem:[#allocation5 + $0xf8] sm:$0xff]
    %v90 = vld [vmem:[#allocation5 + $0x100] sm:$0xff]
    %v91 = vld [vmem:[#allocation5 + $0x108] sm:$0xff]
    %v92 = vld [vmem:[#allocation5 + $0x110] sm:$0xff]
    %v93 = vld [vmem:[#allocation5 + $0x118] sm:$0xff]
    %v94 = vld [vmem:[#allocation5 + $0x120] sm:$0xff]
    %v95 = vld [vmem:[#allocation5 + $0x128] sm:$0xff]
    %v96 = vld [vmem:[#allocation5 + $0x130] sm:$0xff]
    %v97 = vld [vmem:[#allocation5 + $0x138] sm:$0xff]
    %v98 = vld [vmem:[#allocation5 + $0x140] sm:$0xff]
    %v99 = vld [vmem:[#allocation5 + $0x148] sm:$0xff]
    %v100 = vld [vmem:[#allocation5 + $0x150] sm:$0xff]
    %v101 = vld [vmem:[#allocation5 + $0x158] sm:$0xff]
    %v102 = vld [vmem:[#allocation5 + $0x160] sm:$0xff]
    %v103 = vld [vmem:[#allocation5 + $0x168] sm:$0xff]
    %v104 = vld [vmem:[#allocation5 + $0x170] sm:$0xff]
    %v105 = vld [vmem:[#allocation5 + $0x178] sm:$0xff]
    %v106 = vld [vmem:[#allocation5 + $0x180] sm:$0xff]
    %v107 = vld [vmem:[#allocation5 + $0x188] sm:$0xff]
    %v108 = vld [vmem:[#allocation5 + $0x190] sm:$0xff]
    %v109 = vld [vmem:[#allocation5 + $0x198] sm:$0xff]
    %v110 = vld [vmem:[#allocation5 + $0x1a0] sm:$0xff]
    %v111 = vld [vmem:[#allocation5 + $0x1a8] sm:$0xff]
    %v112 = vld [vmem:[#allocation5 + $0x1b0] sm:$0xff]
    %v113 = vld [vmem:[#allocation5 + $0x1b8] sm:$0xff]
    %v114 = vld [vmem:[#allocation5 + $0x1c0] sm:$0xff]
    %v115 = vld [vmem:[#allocation5 + $0x1c8] sm:$0xff]
    %v116 = vld [vmem:[#allocation5 + $0x1d0] sm:$0xff]
    %v117 = vld [vmem:[#allocation5 + $0x1d8] sm:$0xff]
    %v118 = vld [vmem:[#allocation5 + $0x1e0] sm:$0xff]
    %v119 = vld [vmem:[#allocation5 + $0x1e8] sm:$0xff]
    %v120 = vld [vmem:[#allocation5 + $0x1f0] sm:$0xff]
    %v121 = vld [vmem:[#allocation5 + $0x1f8] sm:$0xff]
    %122 = vmatprep.subr.mxu0 %v119
    %123 = vmatpush1.msra.mxu0 %v118
    %124 = vmatprep.subr.mxu0 %v115
    %125 = vmatpush1.msra.mxu0 %v114
    %126 = vmatprep.subr.mxu0 %v111
    %127 = vmatpush1.msra.mxu0 %v110
    %128 = vmatprep.subr.mxu0 %v107
    %129 = vmatpush1.msra.mxu0 %v106
    %130 = vmatprep.subr.mxu0 %v103
    %131 = vmatpush1.msra.mxu0 %v102
    %132 = vmatprep.subr.mxu0 %v99
    %133 = vmatpush1.msra.mxu0 %v98
    %134 = vmatprep.subr.mxu0 %v95
    %135 = vmatpush1.msra.mxu0 %v94
    %136 = vmatprep.subr.mxu0 %v91
    %137 = vmatpush1.msra.mxu0 %v90
    %138 = vmatprep.subr.mxu0 %v87
    %139 = vmatpush1.msra.mxu0 %v86
    %140 = vmatprep.subr.mxu0 %v83
    %141 = vmatpush1.msra.mxu0 %v82
    %142 = vmatprep.subr.mxu0 %v79
    %143 = vmatpush1.msra.mxu0 %v78
    %144 = vmatprep.subr.mxu0 %v75
    %145 = vmatpush1.msra.mxu0 %v74
    %146 = vmatprep.subr.mxu0 %v71
    %147 = vmatpush1.msra.mxu0 %v70
    %148 = vmatprep.subr.mxu0 %v67
    %149 = vmatpush1.msra.mxu0 %v66
    %150 = vmatprep.subr.mxu0 %v63
    %151 = vmatpush1.msra.mxu0 %v62
    %152 = vmatprep.subr.mxu0 %v59
    %153 = vmatpush1.msra.mxu0 %v58
    %154 = vmatprep.subr.mxu0 0.0
    %155 = vmatpush2.msra.mxu0 0.0
    %156 = vmatprep.subr.mxu0 0.0
    %157 = vmatpush2.msra.mxu0 0.0
    %158 = vmatprep.subr.mxu0 0.0
    %159 = vmatpush2.msra.mxu0 0.0
    %160 = vmatprep.subr.mxu0 0.0
    %161 = vmatpush2.msra.mxu0 0.0
    %162 = vmatprep.subr.mxu0 0.0
    %163 = vmatpush2.msra.mxu0 0.0
    %164 = vmatprep.subr.mxu0 0.0
    %165 = vmatpush2.msra.mxu0 0.0
    %166 = vmatprep.subr.mxu0 0.0
    %167 = vmatpush2.msra.mxu0 0.0
    %168 = vmatprep.subr.mxu0 0.0
    %169 = vmatpush2.msra.mxu0 0.0
    %170 = vmatprep.subr.mxu0 0.0
    %171 = vmatpush2.msra.mxu0 0.0
    %172 = vmatprep.subr.mxu0 0.0
    %173 = vmatpush2.msra.mxu0 0.0
    %174 = vmatprep.subr.mxu0 0.0
    %175 = vmatpush2.msra.mxu0 0.0
    %176 = vmatprep.subr.mxu0 0.0
    %177 = vmatpush2.msra.mxu0 0.0
    %178 = vmatprep.subr.mxu0 0.0
    %179 = vmatpush2.msra.mxu0 0.0
    %180 = vmatprep.subr.mxu0 0.0
    %181 = vmatpush2.msra.mxu0 0.0
    %182 = vmatprep.subr.mxu0 0.0
    %183 = vmatpush2.msra.mxu0 0.0
    %184 = vmatprep.subr.mxu0 0.0
    %185 = vmatpush2.msra.mxu0 0.0
    %186 = vmatprep.mubr.f32.mxu0 0.0
    %187 = vmatmul.mubr.f32.gmra.mxu0 %v56
    %v188 = vpop.f32.mrf.mxu0
    %v189 = vadd.f32 0.0, %v188
    %v190 = vpop.f32.mrf.mxu0
    %v191 = vadd.f32 0.0, %v190
    %192 = vmatprep.mubr.f32.mxu0 0.0
    %193 = vmatmul.mubr.f32.gmra.mxu0 %v57
    %v194 = vpop.f32.mrf.mxu0
    %v195 = vadd.f32 0.0, %v194
    %v196 = vpop.f32.mrf.mxu0
    %v197 = vadd.f32 0.0, %v196
    %198 = vdwg.mxu0
    %199 = vmatprep.subr.mxu0 %v121
    %200 = vmatpush1.msra.mxu0 %v120
    %201 = vmatprep.subr.mxu0 %v117
    %202 = vmatpush1.msra.mxu0 %v116
    %203 = vmatprep.subr.mxu0 %v113
    %204 = vmatpush1.msra.mxu0 %v112
    %205 = vmatprep.subr.mxu0 %v109
    %206 = vmatpush1.msra.mxu0 %v108
    %207 = vmatprep.subr.mxu0 %v105
    %208 = vmatpush1.msra.mxu0 %v104
    %209 = vmatprep.subr.mxu0 %v101
    %210 = vmatpush1.msra.mxu0 %v100
    %211 = vmatprep.subr.mxu0 %v97
    %212 = vmatpush1.msra.mxu0 %v96
    %213 = vmatprep.subr.mxu0 %v93
    %214 = vmatpush1.msra.mxu0 %v92
    %215 = vmatprep.subr.mxu0 %v89
    %216 = vmatpush1.msra.mxu0 %v88
    %217 = vmatprep.subr.mxu0 %v85
    %218 = vmatpush1.msra.mxu0 %v84
    %219 = vmatprep.subr.mxu0 %v81
    %220 = vmatpush1.msra.mxu0 %v80
    %221 = vmatprep.subr.mxu0 %v77
    %222 = vmatpush1.msra.mxu0 %v76
    %223 = vmatprep.subr.mxu0 %v73
    %224 = vmatpush1.msra.mxu0 %v72
    %225 = vmatprep.subr.mxu0 %v69
    %226 = vmatpush1.msra.mxu0 %v68
    %227 = vmatprep.subr.mxu0 %v65
    %228 = vmatpush1.msra.mxu0 %v64
    %229 = vmatprep.subr.mxu0 %v61
    %230 = vmatpush1.msra.mxu0 %v60
    %231 = vmatprep.subr.mxu0 0.0
    %232 = vmatpush2.msra.mxu0 0.0
    %233 = vmatprep.subr.mxu0 0.0
    %234 = vmatpush2.msra.mxu0 0.0
    %235 = vmatprep.subr.mxu0 0.0
    %236 = vmatpush2.msra.mxu0 0.0
    %237 = vmatprep.subr.mxu0 0.0
    %238 = vmatpush2.msra.mxu0 0.0
    %239 = vmatprep.subr.mxu0 0.0
    %240 = vmatpush2.msra.mxu0 0.0
    %241 = vmatprep.subr.mxu0 0.0
    %242 = vmatpush2.msra.mxu0 0.0
    %243 = vmatprep.subr.mxu0 0.0
    %244 = vmatpush2.msra.mxu0 0.0
    %245 = vmatprep.subr.mxu0 0.0
    %246 = vmatpush2.msra.mxu0 0.0
    %247 = vmatprep.subr.mxu0 0.0
    %248 = vmatpush2.msra.mxu0 0.0
    %249 = vmatprep.subr.mxu0 0.0
    %250 = vmatpush2.msra.mxu0 0.0
    %251 = vmatprep.subr.mxu0 0.0
    %252 = vmatpush2.msra.mxu0 0.0
    %253 = vmatprep.subr.mxu0 0.0
    %254 = vmatpush2.msra.mxu0 0.0
    %255 = vmatprep.subr.mxu0 0.0
    %256 = vmatpush2.msra.mxu0 0.0
    %257 = vmatprep.subr.mxu0 0.0
    %258 = vmatpush2.msra.mxu0 0.0
    %259 = vmatprep.subr.mxu0 0.0
    %260 = vmatpush2.msra.mxu0 0.0
    %261 = vmatprep.subr.mxu0 0.0
    %262 = vmatpush2.msra.mxu0 0.0
    %263 = vmatprep.mubr.f32.mxu0 0.0
    %264 = vmatmul.mubr.f32.gmra.mxu0 %v56
    %v265 = vpop.f32.mrf.mxu0
    %v266 = vadd.f32 0.0, %v265
    %v267 = vpop.f32.mrf.mxu0
    %v268 = vadd.f32 0.0, %v267
    %269 = vmatprep.mubr.f32.mxu0 0.0
    %270 = vmatmul.mubr.f32.gmra.mxu0 %v57
    %v271 = vpop.f32.mrf.mxu0
    %v272 = vadd.f32 0.0, %v271
    %v273 = vpop.f32.mrf.mxu0
    %v274 = vadd.f32 0.0, %v273
    %275 = vdwg.mxu0
    %v276 = vxor.u32 %v189, 2147483648
    %v277 = vxor.u32 %v191, 2147483648
    %v278 = vxor.u32 %v195, 2147483648
    %v279 = vxor.u32 %v197, 2147483648
    %v280 = vmul.f32 %v276, 1.442695
    %v281 = vpow.pop %v280
    %v282 = vmul.f32 %v277, 1.442695
    %v283 = vpow.pop %v282
    %v284 = vmul.f32 %v278, 1.442695
    %v285 = vpow.pop %v284
    %v286 = vmul.f32 %v279, 1.442695
    %v287 = vpow.pop %v286
    %v288 = vadd.f32 %v281, 1.0
    %v289 = vadd.f32 %v283, 1.0
    %v290 = vadd.f32 %v285, 1.0
    %v291 = vadd.f32 %v287, 1.0
    %v292 = vrcp.pop %v288
    %v293 = vmul.f32 1.0, %v292
    %v294 = vrcp.pop %v289
    %v295 = vmul.f32 1.0, %v294
    %v296 = vrcp.pop %v290
    %v297 = vmul.f32 1.0, %v296
    %v298 = vrcp.pop %v291
    %v299 = vmul.f32 1.0, %v298
    %v300 = vmul.f32 %v189, %v293
    %v301 = vmul.f32 %v191, %v295
    %v302 = vmul.f32 %v195, %v297
    %v303 = vmul.f32 %v197, %v299
    %v304 = vmul.f32 %v300, %v266
    %v305 = vmul.f32 %v301, %v268
    %v306 = vmul.f32 %v302, %v272
    %v307 = vmul.f32 %v303, %v274
    %v308 = vld [vmem:[#allocation7] sm:$0xff]
    %v309 = vld [vmem:[#allocation7 + $0x8] sm:$0xff]
    %v310 = vld [vmem:[#allocation7 + $0x10] sm:$0xff]
    %v311 = vld [vmem:[#allocation7 + $0x18] sm:$0xff]
    %v312 = vld [vmem:[#allocation7 + $0x20] sm:$0xff]
    %v313 = vld [vmem:[#allocation7 + $0x28] sm:$0xff]
    %v314 = vld [vmem:[#allocation7 + $0x30] sm:$0xff]
    %v315 = vld [vmem:[#allocation7 + $0x38] sm:$0xff]
    %v316 = vld [vmem:[#allocation7 + $0x40] sm:$0xff]
    %v317 = vld [vmem:[#allocation7 + $0x48] sm:$0xff]
    %v318 = vld [vmem:[#allocation7 + $0x50] sm:$0xff]
    %v319 = vld [vmem:[#allocation7 + $0x58] sm:$0xff]
    %v320 = vld [vmem:[#allocation7 + $0x60] sm:$0xff]
    %v321 = vld [vmem:[#allocation7 + $0x68] sm:$0xff]
    %v322 = vld [vmem:[#allocation7 + $0x70] sm:$0xff]
    %v323 = vld [vmem:[#allocation7 + $0x78] sm:$0xff]
    %v324 = vld [vmem:[#allocation7 + $0x80] sm:$0xff]
    %v325 = vld [vmem:[#allocation7 + $0x88] sm:$0xff]
    %v326 = vld [vmem:[#allocation7 + $0x90] sm:$0xff]
    %v327 = vld [vmem:[#allocation7 + $0x98] sm:$0xff]
    %v328 = vld [vmem:[#allocation7 + $0xa0] sm:$0xff]
    %v329 = vld [vmem:[#allocation7 + $0xa8] sm:$0xff]
    %v330 = vld [vmem:[#allocation7 + $0xb0] sm:$0xff]
    %v331 = vld [vmem:[#allocation7 + $0xb8] sm:$0xff]
    %v332 = vld [vmem:[#allocation7 + $0xc0] sm:$0xff]
    %v333 = vld [vmem:[#allocation7 + $0xc8] sm:$0xff]
    %v334 = vld [vmem:[#allocation7 + $0xd0] sm:$0xff]
    %v335 = vld [vmem:[#allocation7 + $0xd8] sm:$0xff]
    %v336 = vld [vmem:[#allocation7 + $0xe0] sm:$0xff]
    %v337 = vld [vmem:[#allocation7 + $0xe8] sm:$0xff]
    %v338 = vld [vmem:[#allocation7 + $0xf0] sm:$0xff]
    %v339 = vld [vmem:[#allocation7 + $0xf8] sm:$0xff]
    %340 = vmatprep.subr.mxu0 0.0
    %341 = vmatpush1.msra.mxu0 %v323
    %342 = vmatprep.subr.mxu0 0.0
    %343 = vmatpush1.msra.mxu0 %v322
    %344 = vmatprep.subr.mxu0 0.0
    %345 = vmatpush1.msra.mxu0 %v321
    %346 = vmatprep.subr.mxu0 0.0
    %347 = vmatpush1.msra.mxu0 %v320
    %348 = vmatprep.subr.mxu0 0.0
    %349 = vmatpush1.msra.mxu0 %v319
    %350 = vmatprep.subr.mxu0 0.0
    %351 = vmatpush1.msra.mxu0 %v318
    %352 = vmatprep.subr.mxu0 0.0
    %353 = vmatpush1.msra.mxu0 %v317
    %354 = vmatprep.subr.mxu0 0.0
    %355 = vmatpush1.msra.mxu0 %v316
    %356 = vmatprep.subr.mxu0 0.0
    %357 = vmatpush1.msra.mxu0 %v315
    %358 = vmatprep.subr.mxu0 0.0
    %359 = vmatpush1.msra.mxu0 %v314
    %360 = vmatprep.subr.mxu0 0.0
    %361 = vmatpush1.msra.mxu0 %v313
    %362 = vmatprep.subr.mxu0 0.0
    %363 = vmatpush1.msra.mxu0 %v312
    %364 = vmatprep.subr.mxu0 0.0
    %365 = vmatpush1.msra.mxu0 %v311
    %366 = vmatprep.subr.mxu0 0.0
    %367 = vmatpush1.msra.mxu0 %v310
    %368 = vmatprep.subr.mxu0 0.0
    %369 = vmatpush1.msra.mxu0 %v309
    %370 = vmatprep.subr.mxu0 0.0
    %371 = vmatpush1.msra.mxu0 %v308
    %372 = vmatprep.subr.mxu0 0.0
    %373 = vmatpush2.msra.mxu0 %v339
    %374 = vmatprep.subr.mxu0 0.0
    %375 = vmatpush2.msra.mxu0 %v338
    %376 = vmatprep.subr.mxu0 0.0
    %377 = vmatpush2.msra.mxu0 %v337
    %378 = vmatprep.subr.mxu0 0.0
    %379 = vmatpush2.msra.mxu0 %v336
    %380 = vmatprep.subr.mxu0 0.0
    %381 = vmatpush2.msra.mxu0 %v335
    %382 = vmatprep.subr.mxu0 0.0
    %383 = vmatpush2.msra.mxu0 %v334
    %384 = vmatprep.subr.mxu0 0.0
    %385 = vmatpush2.msra.mxu0 %v333
    %386 = vmatprep.subr.mxu0 0.0
    %387 = vmatpush2.msra.mxu0 %v332
    %388 = vmatprep.subr.mxu0 0.0
    %389 = vmatpush2.msra.mxu0 %v331
    %390 = vmatprep.subr.mxu0 0.0
    %391 = vmatpush2.msra.mxu0 %v330
    %392 = vmatprep.subr.mxu0 0.0
    %393 = vmatpush2.msra.mxu0 %v329
    %394 = vmatprep.subr.mxu0 0.0
    %395 = vmatpush2.msra.mxu0 %v328
    %396 = vmatprep.subr.mxu0 0.0
    %397 = vmatpush2.msra.mxu0 %v327
    %398 = vmatprep.subr.mxu0 0.0
    %399 = vmatpush2.msra.mxu0 %v326
    %400 = vmatprep.subr.mxu0 0.0
    %401 = vmatpush2.msra.mxu0 %v325
    %402 = vmatprep.subr.mxu0 0.0
    %403 = vmatpush2.msra.mxu0 %v324
    %404 = vmatprep.mubr.f32.mxu0 %v305
    %405 = vmatmul.mubr.f32.gmra.mxu0 %v304
    %v406 = vpop.f32.mrf.mxu0
    %v407 = vadd.f32 0.0, %v406
    %v408 = vpop.f32.mrf.mxu0
    %409 = vmatprep.mubr.f32.mxu0 %v307
    %410 = vmatmul.mubr.f32.gmra.mxu0 %v306
    %v411 = vpop.f32.mrf.mxu0
    %v412 = vadd.f32 0.0, %v411
    %v413 = vpop.f32.mrf.mxu0
    %414 = vdwg.mxu0
    %415 = vst [vmem:[#allocation8] sm:$0xff] %v407
    %416 = vst [vmem:[#allocation8 + $0x8] sm:$0xff] %v412
    // Predicated region
    $region26: #{tpu_custom_call.1} parent=1 // pred_check
      _
    $region27: #{tpu_custom_call.1} parent=1 // pred_check_branch
      %418 = sbr.rel (0) target = $region29
    $region28: #{tpu_custom_call.1} parent=1 // pred_region
      %s420 = ssub.s32 256, 256
      %421 = vsyncadd [#allocation4], %s420
      %s422 = sshll.u32 [#allocation8], 4
      %s423 = int_to_ptr.vmem [resolvable:$true] %s422
      %428 = dma.vmem_to_hbm [thread:$0]  %s423, 256, %s3, [#allocation4], 128, 128, 8
    $region29: #{tpu_custom_call.1} parent=1 // pred_fallthru
      _
    // Predicated region
    $region30: #{tpu_custom_call.1} parent=1 // pred_check
      _
    $region31: #{tpu_custom_call.1} parent=1 // pred_check_branch
      %430 = sbr.rel (0) target = $region33
    $region32: #{tpu_custom_call.1} parent=1 // pred_region
      %431 = dma.done [#allocation4], 256
    $region33: #{tpu_custom_call.1} parent=1 // pred_fallthru
      _
    %432 = vsyncpa [#allocation3], 1
    %433 = vsyncpa [#allocation6], 1
    %434 = vsyncpa [#allocation4], 1

// kernel: tpu_custom_call.1
$region0: #{tpu_custom_call.1}
  #allocation0 [shape = 'u32[]', space=smem, size = 0x4, offset = 0x4, fixed_abs, tag = 'smem constant byte address 0x4 - core index']
  #allocation1 [shape = 'u32[144,128]{1,0:T(1,128)}', space=vmem, size = 0x12000, scoped, tag = 'internal scratch']
  %s0 = inlined_call_operand.hbm [shape: f32[16,128], index: 0, kind: input, shape index: {}]
  %s1 = inlined_call_operand.hbm [shape: f32[128,512], index: 1, kind: input, shape index: {}]
  %s2 = inlined_call_operand.hbm [shape: f32[256,128], index: 2, kind: input, shape index: {}]
  %s3 = inlined_call_operand.hbm [shape: f32[16,128], index: 3, kind: output, shape index: {}]
  %s4 = sld [smem:[#allocation0]]
  $region34: #{tpu_custom_call.1} parent=0
    _
  %s6 = ssub.s32 1, %s4
  %s7 = scalar_select 0, %s6, %s4
  $region1: #{tpu_custom_call.1} parent=0
    #allocation2 [shape = 'u8[8192]{0}', space=vmem, size = 0x2000, scoped, tag = 'input window, operand 0, single buffered']
    #allocation3 [shape = 's32[1]{0}', space=sflag, size = 0x4, scoped, tag = 'scoped memory for tpu_custom_call.1']
    #allocation4 [shape = 's32[1]{0}', space=sflag, size = 0x4, scoped, tag = 'scoped memory for tpu_custom_call.1']
    #allocation5 [shape = 'u8[262144]{0}', space=vmem, size = 0x40000, scoped, tag = 'input window, operand 1, single buffered']
    #allocation6 [shape = 's32[1]{0}', space=sflag, size = 0x4, scoped, tag = 'scoped memory for tpu_custom_call.1']
    #allocation7 [shape = 'u8[131072]{0}', space=vmem, size = 0x20000, scoped, tag = 'input window, operand 2, single buffered']
    #allocation8 [shape = 'u8[8192]{0}', space=vmem, size = 0x2000, scoped, tag = 'output window, operand 0, single buffered']
    %8 = vsyncpa [#allocation3], 0
    %9 = vsyncpa [#allocation6], 0
    %10 = vsyncpa [#allocation4], 0
    // Predicated region
    $region2: #{tpu_custom_call.1} parent=1 // pred_check
      _
    $region3: #{tpu_custom_call.1} parent=1 // pred_check_branch
      %12 = sbr.rel (0) target = $region5
    $region4: #{tpu_custom_call.1} parent=1 // pred_region
      %s14 = ssub.s32 256, 256
      %15 = vsyncadd [#allocation3], %s14
      %s16 = sshll.u32 [#allocation2], 4
      %s17 = int_to_ptr.vmem [resolvable:$true] %s16
      %22 = dma.hbm_to_vmem [thread:$0]  %s0, 256, %s17, [#allocation3], 128, 128, 8
    $region5: #{tpu_custom_call.1} parent=1 // pred_fallthru
      _
    // Predicated region
    $region6: #{tpu_custom_call.1} parent=1 // pred_check
      _
    $region7: #{tpu_custom_call.1} parent=1 // pred_check_branch
      %24 = sbr.rel (0) target = $region9
    $region8: #{tpu_custom_call.1} parent=1 // pred_region
      %s26 = ssub.s32 8192, 8192
      %27 = vsyncadd [#allocation6], %s26
      %s28 = sshll.u32 [#allocation5], 4
      %s29 = int_to_ptr.vmem [resolvable:$true] %s28
      %34 = dma.hbm_to_vmem [thread:$0]  %s1, 8192, %s29, [#allocation6], 512, 512, 32
    $region9: #{tpu_custom_call.1} parent=1 // pred_fallthru
      _
    // Predicated region
    $region10: #{tpu_custom_call.1} parent=1 // pred_check
      _
    $region11: #{tpu_custom_call.1} parent=1 // pred_check_branch
      %36 = sbr.rel (0) target = $region13
    $region12: #{tpu_custom_call.1} parent=1 // pred_region
      %s38 = ssub.s32 4096, 4096
      %39 = vsyncadd [#allocation6], %s38
      %s40 = sshll.u32 [#allocation7], 4
      %s41 = int_to_ptr.vmem [resolvable:$true] %s40
      %46 = dma.hbm_to_vmem [thread:$0]  %s2, 4096, %s41, [#allocation6], 128, 128, 8
    $region13: #{tpu_custom_call.1} parent=1 // pred_fallthru
      _
    // Predicated region
    $region14: #{tpu_custom_call.1} parent=1 // pred_check
      _
    $region15: #{tpu_custom_call.1} parent=1 // pred_check_branch
      %48 = sbr.rel (0) target = $region17
    $region16: #{tpu_custom_call.1} parent=1 // pred_region
      %49 = dma.done [#allocation3], 256
    $region17: #{tpu_custom_call.1} parent=1 // pred_fallthru
      _
    // Predicated region
    $region18: #{tpu_custom_call.1} parent=1 // pred_check
      _
    $region19: #{tpu_custom_call.1} parent=1 // pred_check_branch
      %51 = sbr.rel (0) target = $region21
    $region20: #{tpu_custom_call.1} parent=1 // pred_region
      %52 = dma.done [#allocation6], 8192
    $region21: #{tpu_custom_call.1} parent=1 // pred_fallthru
      _
    // Predicated region
    $region22: #{tpu_custom_call.1} parent=1 // pred_check
      _
    $region23: #{tpu_custom_call.1} parent=1 // pred_check_branch
      %54 = sbr.rel (0) target = $region25
    $region24: #{tpu_custom_call.1} parent=1 // pred_region
      %55 = dma.done [#allocation6], 4096
    $region25: #{tpu_custom_call.1} parent=1 // pred_fallthru
      _
    %v56 = vld [vmem:[#allocation2] sm:$0xff]
    %v57 = vld [vmem:[#allocation2 + $0x8] sm:$0xff]
    %v58 = vld [vmem:[#allocation5] sm:$0xff]
    %v59 = vld [vmem:[#allocation5 + $0x8] sm:$0xff]
    %v60 = vld [vmem:[#allocation5 + $0x10] sm:$0xff]
    %v61 = vld [vmem:[#allocation5 + $0x18] sm:$0xff]
    %v62 = vld [vmem:[#allocation5 + $0x20] sm:$0xff]
    %v63 = vld [vmem:[#allocation5 + $0x28] sm:$0xff]
    %v64 = vld [vmem:[#allocation5 + $0x30] sm:$0xff]
    %v65 = vld [vmem:[#allocation5 + $0x38] sm:$0xff]
    %v66 = vld [vmem:[#allocation5 + $0x40] sm:$0xff]
    %v67 = vld [vmem:[#allocation5 + $0x48] sm:$0xff]
    %v68 = vld [vmem:[#allocation5 + $0x50] sm:$0xff]
    %v69 = vld [vmem:[#allocation5 + $0x58] sm:$0xff]
    %v70 = vld [vmem:[#allocation5 + $0x60] sm:$0xff]
    %v71 = vld [vmem:[#allocation5 + $0x68] sm:$0xff]
    %v72 = vld [vmem:[#allocation5 + $0x70] sm:$0xff]
    %v73 = vld [vmem:[#allocation5 + $0x78] sm:$0xff]
    %v74 = vld [vmem:[#allocation5 + $0x80] sm:$0xff]
    %v75 = vld [vmem:[#allocation5 + $0x88] sm:$0xff]
    %v76 = vld [vmem:[#allocation5 + $0x90] sm:$0xff]
    %v77 = vld [vmem:[#allocation5 + $0x98] sm:$0xff]
    %v78 = vld [vmem:[#allocation5 + $0xa0] sm:$0xff]
    %v79 = vld [vmem:[#allocation5 + $0xa8] sm:$0xff]
    %v80 = vld [vmem:[#allocation5 + $0xb0] sm:$0xff]
    %v81 = vld [vmem:[#allocation5 + $0xb8] sm:$0xff]
    %v82 = vld [vmem:[#allocation5 + $0xc0] sm:$0xff]
    %v83 = vld [vmem:[#allocation5 + $0xc8] sm:$0xff]
    %v84 = vld [vmem:[#allocation5 + $0xd0] sm:$0xff]
    %v85 = vld [vmem:[#allocation5 + $0xd8] sm:$0xff]
    %v86 = vld [vmem:[#allocation5 + $0xe0] sm:$0xff]
    %v87 = vld [vmem:[#allocation5 + $0xe8] sm:$0xff]
    %v88 = vld [vmem:[#allocation5 + $0xf0] sm:$0xff]
    %v89 = vld [vmem:[#allocation5 + $0xf8] sm:$0xff]
    %v90 = vld [vmem:[#allocation5 + $0x100] sm:$0xff]
    %v91 = vld [vmem:[#allocation5 + $0x108] sm:$0xff]
    %v92 = vld [vmem:[#allocation5 + $0x110] sm:$0xff]
    %v93 = vld [vmem:[#allocation5 + $0x118] sm:$0xff]
    %v94 = vld [vmem:[#allocation5 + $0x120] sm:$0xff]
    %v95 = vld [vmem:[#allocation5 + $0x128] sm:$0xff]
    %v96 = vld [vmem:[#allocation5 + $0x130] sm:$0xff]
    %v97 = vld [vmem:[#allocation5 + $0x138] sm:$0xff]
    %v98 = vld [vmem:[#allocation5 + $0x140] sm:$0xff]
    %v99 = vld [vmem:[#allocation5 + $0x148] sm:$0xff]
    %v100 = vld [vmem:[#allocation5 + $0x150] sm:$0xff]
    %v101 = vld [vmem:[#allocation5 + $0x158] sm:$0xff]
    %v102 = vld [vmem:[#allocation5 + $0x160] sm:$0xff]
    %v103 = vld [vmem:[#allocation5 + $0x168] sm:$0xff]
    %v104 = vld [vmem:[#allocation5 + $0x170] sm:$0xff]
    %v105 = vld [vmem:[#allocation5 + $0x178] sm:$0xff]
    %v106 = vld [vmem:[#allocation5 + $0x180] sm:$0xff]
    %v107 = vld [vmem:[#allocation5 + $0x188] sm:$0xff]
    %v108 = vld [vmem:[#allocation5 + $0x190] sm:$0xff]
    %v109 = vld [vmem:[#allocation5 + $0x198] sm:$0xff]
    %v110 = vld [vmem:[#allocation5 + $0x1a0] sm:$0xff]
    %v111 = vld [vmem:[#allocation5 + $0x1a8] sm:$0xff]
    %v112 = vld [vmem:[#allocation5 + $0x1b0] sm:$0xff]
    %v113 = vld [vmem:[#allocation5 + $0x1b8] sm:$0xff]
    %v114 = vld [vmem:[#allocation5 + $0x1c0] sm:$0xff]
    %v115 = vld [vmem:[#allocation5 + $0x1c8] sm:$0xff]
    %v116 = vld [vmem:[#allocation5 + $0x1d0] sm:$0xff]
    %v117 = vld [vmem:[#allocation5 + $0x1d8] sm:$0xff]
    %v118 = vld [vmem:[#allocation5 + $0x1e0] sm:$0xff]
    %v119 = vld [vmem:[#allocation5 + $0x1e8] sm:$0xff]
    %v120 = vld [vmem:[#allocation5 + $0x1f0] sm:$0xff]
    %v121 = vld [vmem:[#allocation5 + $0x1f8] sm:$0xff]
    %122 = vmatprep.subr.mxu0 %v119
    %123 = vmatpush1.msra.mxu0 %v118
    %124 = vmatprep.subr.mxu0 %v115
    %125 = vmatpush1.msra.mxu0 %v114
    %126 = vmatprep.subr.mxu0 %v111
    %127 = vmatpush1.msra.mxu0 %v110
    %128 = vmatprep.subr.mxu0 %v107
    %129 = vmatpush1.msra.mxu0 %v106
    %130 = vmatprep.subr.mxu0 %v103
    %131 = vmatpush1.msra.mxu0 %v102
    %132 = vmatprep.subr.mxu0 %v99
    %133 = vmatpush1.msra.mxu0 %v98
    %134 = vmatprep.subr.mxu0 %v95
    %135 = vmatpush1.msra.mxu0 %v94
    %136 = vmatprep.subr.mxu0 %v91
    %137 = vmatpush1.msra.mxu0 %v90
    %138 = vmatprep.subr.mxu0 %v87
    %139 = vmatpush1.msra.mxu0 %v86
    %140 = vmatprep.subr.mxu0 %v83
    %141 = vmatpush1.msra.mxu0 %v82
    %142 = vmatprep.subr.mxu0 %v79
    %143 = vmatpush1.msra.mxu0 %v78
    %144 = vmatprep.subr.mxu0 %v75
    %145 = vmatpush1.msra.mxu0 %v74
    %146 = vmatprep.subr.mxu0 %v71
    %147 = vmatpush1.msra.mxu0 %v70
    %148 = vmatprep.subr.mxu0 %v67
    %149 = vmatpush1.msra.mxu0 %v66
    %150 = vmatprep.subr.mxu0 %v63
    %151 = vmatpush1.msra.mxu0 %v62
    %152 = vmatprep.subr.mxu0 %v59
    %153 = vmatpush1.msra.mxu0 %v58
    %154 = vmatprep.subr.mxu0 0.0
    %155 = vmatpush2.msra.mxu0 0.0
    %156 = vmatprep.subr.mxu0 0.0
    %157 = vmatpush2.msra.mxu0 0.0
    %158 = vmatprep.subr.mxu0 0.0
    %159 = vmatpush2.msra.mxu0 0.0
    %160 = vmatprep.subr.mxu0 0.0
    %161 = vmatpush2.msra.mxu0 0.0
    %162 = vmatprep.subr.mxu0 0.0
    %163 = vmatpush2.msra.mxu0 0.0
    %164 = vmatprep.subr.mxu0 0.0
    %165 = vmatpush2.msra.mxu0 0.0
    %166 = vmatprep.subr.mxu0 0.0
    %167 = vmatpush2.msra.mxu0 0.0
    %168 = vmatprep.subr.mxu0 0.0
    %169 = vmatpush2.msra.mxu0 0.0
    %170 = vmatprep.subr.mxu0 0.0
    %171 = vmatpush2.msra.mxu0 0.0
    %172 = vmatprep.subr.mxu0 0.0
    %173 = vmatpush2.msra.mxu0 0.0
    %174 = vmatprep.subr.mxu0 0.0
    %175 = vmatpush2.msra.mxu0 0.0
    %176 = vmatprep.subr.mxu0 0.0
    %177 = vmatpush2.msra.mxu0 0.0
    %178 = vmatprep.subr.mxu0 0.0
    %179 = vmatpush2.msra.mxu0 0.0
    %180 = vmatprep.subr.mxu0 0.0
    %181 = vmatpush2.msra.mxu0 0.0
    %182 = vmatprep.subr.mxu0 0.0
    %183 = vmatpush2.msra.mxu0 0.0
    %184 = vmatprep.subr.mxu0 0.0
    %185 = vmatpush2.msra.mxu0 0.0
    %186 = vmatprep.mubr.f32.mxu0 0.0
    %187 = vmatmul.mubr.f32.gmra.mxu0 %v56
    %v188 = vpop.f32.mrf.mxu0
    %v189 = vadd.f32 0.0, %v188
    %v190 = vpop.f32.mrf.mxu0
    %v191 = vadd.f32 0.0, %v190
    %192 = vmatprep.mubr.f32.mxu0 0.0
    %193 = vmatmul.mubr.f32.gmra.mxu0 %v57
    %v194 = vpop.f32.mrf.mxu0
    %v195 = vadd.f32 0.0, %v194
    %v196 = vpop.f32.mrf.mxu0
    %v197 = vadd.f32 0.0, %v196
    %198 = vdwg.mxu0
    %199 = vmatprep.subr.mxu0 %v121
    %200 = vmatpush1.msra.mxu0 %v120
    %201 = vmatprep.subr.mxu0 %v117
    %202 = vmatpush1.msra.mxu0 %v116
    %203 = vmatprep.subr.mxu0 %v113
    %204 = vmatpush1.msra.mxu0 %v112
    %205 = vmatprep.subr.mxu0 %v109
    %206 = vmatpush1.msra.mxu0 %v108
    %207 = vmatprep.subr.mxu0 %v105
    %208 = vmatpush1.msra.mxu0 %v104
    %209 = vmatprep.subr.mxu0 %v101
    %210 = vmatpush1.msra.mxu0 %v100
    %211 = vmatprep.subr.mxu0 %v97
    %212 = vmatpush1.msra.mxu0 %v96
    %213 = vmatprep.subr.mxu0 %v93
    %214 = vmatpush1.msra.mxu0 %v92
    %215 = vmatprep.subr.mxu0 %v89
    %216 = vmatpush1.msra.mxu0 %v88
    %217 = vmatprep.subr.mxu0 %v85
    %218 = vmatpush1.msra.mxu0 %v84
    %219 = vmatprep.subr.mxu0 %v81
    %220 = vmatpush1.msra.mxu0 %v80
    %221 = vmatprep.subr.mxu0 %v77
    %222 = vmatpush1.msra.mxu0 %v76
    %223 = vmatprep.subr.mxu0 %v73
    %224 = vmatpush1.msra.mxu0 %v72
    %225 = vmatprep.subr.mxu0 %v69
    %226 = vmatpush1.msra.mxu0 %v68
    %227 = vmatprep.subr.mxu0 %v65
    %228 = vmatpush1.msra.mxu0 %v64
    %229 = vmatprep.subr.mxu0 %v61
    %230 = vmatpush1.msra.mxu0 %v60
    %231 = vmatprep.subr.mxu0 0.0
    %232 = vmatpush2.msra.mxu0 0.0
    %233 = vmatprep.subr.mxu0 0.0
    %234 = vmatpush2.msra.mxu0 0.0
    %235 = vmatprep.subr.mxu0 0.0
    %236 = vmatpush2.msra.mxu0 0.0
    %237 = vmatprep.subr.mxu0 0.0
    %238 = vmatpush2.msra.mxu0 0.0
    %239 = vmatprep.subr.mxu0 0.0
    %240 = vmatpush2.msra.mxu0 0.0
    %241 = vmatprep.subr.mxu0 0.0
    %242 = vmatpush2.msra.mxu0 0.0
    %243 = vmatprep.subr.mxu0 0.0
    %244 = vmatpush2.msra.mxu0 0.0
    %245 = vmatprep.subr.mxu0 0.0
    %246 = vmatpush2.msra.mxu0 0.0
    %247 = vmatprep.subr.mxu0 0.0
    %248 = vmatpush2.msra.mxu0 0.0
    %249 = vmatprep.subr.mxu0 0.0
    %250 = vmatpush2.msra.mxu0 0.0
    %251 = vmatprep.subr.mxu0 0.0
    %252 = vmatpush2.msra.mxu0 0.0
    %253 = vmatprep.subr.mxu0 0.0
    %254 = vmatpush2.msra.mxu0 0.0
    %255 = vmatprep.subr.mxu0 0.0
    %256 = vmatpush2.msra.mxu0 0.0
    %257 = vmatprep.subr.mxu0 0.0
    %258 = vmatpush2.msra.mxu0 0.0
    %259 = vmatprep.subr.mxu0 0.0
    %260 = vmatpush2.msra.mxu0 0.0
    %261 = vmatprep.subr.mxu0 0.0
    %262 = vmatpush2.msra.mxu0 0.0
    %263 = vmatprep.mubr.f32.mxu0 0.0
    %264 = vmatmul.mubr.f32.gmra.mxu0 %v56
    %v265 = vpop.f32.mrf.mxu0
    %v266 = vadd.f32 0.0, %v265
    %v267 = vpop.f32.mrf.mxu0
    %v268 = vadd.f32 0.0, %v267
    %269 = vmatprep.mubr.f32.mxu0 0.0
    %270 = vmatmul.mubr.f32.gmra.mxu0 %v57
    %v271 = vpop.f32.mrf.mxu0
    %v272 = vadd.f32 0.0, %v271
    %v273 = vpop.f32.mrf.mxu0
    %v274 = vadd.f32 0.0, %v273
    %275 = vdwg.mxu0
    %v276 = vxor.u32 %v189, 2147483648
    %v277 = vxor.u32 %v191, 2147483648
    %v278 = vxor.u32 %v195, 2147483648
    %v279 = vxor.u32 %v197, 2147483648
    %v280 = vmul.f32 %v276, 1.442695
    %v281 = vpow.pop %v280
    %v282 = vmul.f32 %v277, 1.442695
    %v283 = vpow.pop %v282
    %v284 = vmul.f32 %v278, 1.442695
    %v285 = vpow.pop %v284
    %v286 = vmul.f32 %v279, 1.442695
    %v287 = vpow.pop %v286
    %v288 = vadd.f32 %v281, 1.0
    %v289 = vadd.f32 %v283, 1.0
    %v290 = vadd.f32 %v285, 1.0
    %v291 = vadd.f32 %v287, 1.0
    %v292 = vrcp.pop %v288
    %v293 = vmul.f32 1.0, %v292
    %v294 = vrcp.pop %v289
    %v295 = vmul.f32 1.0, %v294
    %v296 = vrcp.pop %v290
    %v297 = vmul.f32 1.0, %v296
    %v298 = vrcp.pop %v291
    %v299 = vmul.f32 1.0, %v298
    %v300 = vmul.f32 %v189, %v293
    %v301 = vmul.f32 %v191, %v295
    %v302 = vmul.f32 %v195, %v297
    %v303 = vmul.f32 %v197, %v299
    %v304 = vmul.f32 %v300, %v266
    %v305 = vmul.f32 %v301, %v268
    %v306 = vmul.f32 %v302, %v272
    %v307 = vmul.f32 %v303, %v274
    %v308 = vld [vmem:[#allocation7] sm:$0xff]
    %v309 = vld [vmem:[#allocation7 + $0x8] sm:$0xff]
    %v310 = vld [vmem:[#allocation7 + $0x10] sm:$0xff]
    %v311 = vld [vmem:[#allocation7 + $0x18] sm:$0xff]
    %v312 = vld [vmem:[#allocation7 + $0x20] sm:$0xff]
    %v313 = vld [vmem:[#allocation7 + $0x28] sm:$0xff]
    %v314 = vld [vmem:[#allocation7 + $0x30] sm:$0xff]
    %v315 = vld [vmem:[#allocation7 + $0x38] sm:$0xff]
    %v316 = vld [vmem:[#allocation7 + $0x40] sm:$0xff]
    %v317 = vld [vmem:[#allocation7 + $0x48] sm:$0xff]
    %v318 = vld [vmem:[#allocation7 + $0x50] sm:$0xff]
    %v319 = vld [vmem:[#allocation7 + $0x58] sm:$0xff]
    %v320 = vld [vmem:[#allocation7 + $0x60] sm:$0xff]
    %v321 = vld [vmem:[#allocation7 + $0x68] sm:$0xff]
    %v322 = vld [vmem:[#allocation7 + $0x70] sm:$0xff]
    %v323 = vld [vmem:[#allocation7 + $0x78] sm:$0xff]
    %v324 = vld [vmem:[#allocation7 + $0x80] sm:$0xff]
    %v325 = vld [vmem:[#allocation7 + $0x88] sm:$0xff]
    %v326 = vld [vmem:[#allocation7 + $0x90] sm:$0xff]
    %v327 = vld [vmem:[#allocation7 + $0x98] sm:$0xff]
    %v328 = vld [vmem:[#allocation7 + $0xa0] sm:$0xff]
    %v329 = vld [vmem:[#allocation7 + $0xa8] sm:$0xff]
    %v330 = vld [vmem:[#allocation7 + $0xb0] sm:$0xff]
    %v331 = vld [vmem:[#allocation7 + $0xb8] sm:$0xff]
    %v332 = vld [vmem:[#allocation7 + $0xc0] sm:$0xff]
    %v333 = vld [vmem:[#allocation7 + $0xc8] sm:$0xff]
    %v334 = vld [vmem:[#allocation7 + $0xd0] sm:$0xff]
    %v335 = vld [vmem:[#allocation7 + $0xd8] sm:$0xff]
    %v336 = vld [vmem:[#allocation7 + $0xe0] sm:$0xff]
    %v337 = vld [vmem:[#allocation7 + $0xe8] sm:$0xff]
    %v338 = vld [vmem:[#allocation7 + $0xf0] sm:$0xff]
    %v339 = vld [vmem:[#allocation7 + $0xf8] sm:$0xff]
    %340 = vmatprep.subr.mxu0 0.0
    %341 = vmatpush1.msra.mxu0 %v323
    %342 = vmatprep.subr.mxu0 0.0
    %343 = vmatpush1.msra.mxu0 %v322
    %344 = vmatprep.subr.mxu0 0.0
    %345 = vmatpush1.msra.mxu0 %v321
    %346 = vmatprep.subr.mxu0 0.0
    %347 = vmatpush1.msra.mxu0 %v320
    %348 = vmatprep.subr.mxu0 0.0
    %349 = vmatpush1.msra.mxu0 %v319
    %350 = vmatprep.subr.mxu0 0.0
    %351 = vmatpush1.msra.mxu0 %v318
    %352 = vmatprep.subr.mxu0 0.0
    %353 = vmatpush1.msra.mxu0 %v317
    %354 = vmatprep.subr.mxu0 0.0
    %355 = vmatpush1.msra.mxu0 %v316
    %356 = vmatprep.subr.mxu0 0.0
    %357 = vmatpush1.msra.mxu0 %v315
    %358 = vmatprep.subr.mxu0 0.0
    %359 = vmatpush1.msra.mxu0 %v314
    %360 = vmatprep.subr.mxu0 0.0
    %361 = vmatpush1.msra.mxu0 %v313
    %362 = vmatprep.subr.mxu0 0.0
    %363 = vmatpush1.msra.mxu0 %v312
    %364 = vmatprep.subr.mxu0 0.0
    %365 = vmatpush1.msra.mxu0 %v311
    %366 = vmatprep.subr.mxu0 0.0
    %367 = vmatpush1.msra.mxu0 %v310
    %368 = vmatprep.subr.mxu0 0.0
    %369 = vmatpush1.msra.mxu0 %v309
    %370 = vmatprep.subr.mxu0 0.0
    %371 = vmatpush1.msra.mxu0 %v308
    %372 = vmatprep.subr.mxu0 0.0
    %373 = vmatpush2.msra.mxu0 %v339
    %374 = vmatprep.subr.mxu0 0.0
    %375 = vmatpush2.msra.mxu0 %v338
    %376 = vmatprep.subr.mxu0 0.0
    %377 = vmatpush2.msra.mxu0 %v337
    %378 = vmatprep.subr.mxu0 0.0
    %379 = vmatpush2.msra.mxu0 %v336
    %380 = vmatprep.subr.mxu0 0.0
    %381 = vmatpush2.msra.mxu0 %v335
    %382 = vmatprep.subr.mxu0 0.0
    %383 = vmatpush2.msra.mxu0 %v334
    %384 = vmatprep.subr.mxu0 0.0
    %385 = vmatpush2.msra.mxu0 %v333
    %386 = vmatprep.subr.mxu0 0.0
    %387 = vmatpush2.msra.mxu0 %v332
    %388 = vmatprep.subr.mxu0 0.0
    %389 = vmatpush2.msra.mxu0 %v331
    %390 = vmatprep.subr.mxu0 0.0
    %391 = vmatpush2.msra.mxu0 %v330
    %392 = vmatprep.subr.mxu0 0.0
    %393 = vmatpush2.msra.mxu0 %v329
    %394 = vmatprep.subr.mxu0 0.0
    %395 = vmatpush2.msra.mxu0 %v328
    %396 = vmatprep.subr.mxu0 0.0
    %397 = vmatpush2.msra.mxu0 %v327
    %398 = vmatprep.subr.mxu0 0.0
    %399 = vmatpush2.msra.mxu0 %v326
    %400 = vmatprep.subr.mxu0 0.0
    %401 = vmatpush2.msra.mxu0 %v325
    %402 = vmatprep.subr.mxu0 0.0
    %403 = vmatpush2.msra.mxu0 %v324
    %404 = vmatprep.mubr.f32.mxu0 %v305
    %405 = vmatmul.mubr.f32.gmra.mxu0 %v304
    %v406 = vpop.f32.mrf.mxu0
    %v407 = vadd.f32 0.0, %v406
    %v408 = vpop.f32.mrf.mxu0
    %409 = vmatprep.mubr.f32.mxu0 %v307
    %410 = vmatmul.mubr.f32.gmra.mxu0 %v306
    %v411 = vpop.f32.mrf.mxu0
    %v412 = vadd.f32 0.0, %v411
    %v413 = vpop.f32.mrf.mxu0
    %414 = vdwg.mxu0
    %415 = vst [vmem:[#allocation8] sm:$0xff] %v407
    %416 = vst [vmem:[#allocation8 + $0x8] sm:$0xff] %v412
    // Predicated region
    $region26: #{tpu_custom_call.1} parent=1 // pred_check
      _
    $region27: #{tpu_custom_call.1} parent=1 // pred_check_branch
      %418 = sbr.rel (0) target = $region29
    $region28: #{tpu_custom_call.1} parent=1 // pred_region
      %s420 = ssub.s32 256, 256
      %421 = vsyncadd [#allocation4], %s420
      %s422 = sshll.u32 [#allocation8], 4
      %s423 = int_to_ptr.vmem [resolvable:$true] %s422
      %428 = dma.vmem_to_hbm [thread:$0]  %s423, 256, %s3, [#allocation4], 128, 128, 8
    $region29: #{tpu_custom_call.1} parent=1 // pred_fallthru
      _
    // Predicated region
    $region30: #{tpu_custom_call.1} parent=1 // pred_check
      _
    $region31: #{tpu_custom_call.1} parent=1 // pred_check_branch
      %430 = sbr.rel (0) target = $region33
    $region32: #{tpu_custom_call.1} parent=1 // pred_region
      %431 = dma.done [#allocation4], 256
    $region33: #{tpu_custom_call.1} parent=1 // pred_fallthru
      _
    %432 = vsyncpa [#allocation3], 1
    %433 = vsyncpa [#allocation6], 1
    %434 = vsyncpa [#allocation4], 1

</llo_original>
